<compile_context>
chip_gen: v7x
topology: tpu7x:2x2x1
jax: 0.10.0
libtpu: 0.0.40
codegen_flags: <defaults>
</compile_context>

<pallas_src>
import jax
import jax.numpy as jnp
from jax import lax
from jax.experimental import pallas as pl
from jax.experimental.pallas import tpu as pltpu

CONF_THRESH = 0.35
LANE = 128
SUBLANE = 8


def _detect_kernel(idx_ref, table_ref, out_ref):
    # idx_ref  : (K_padded,) int32 in SMEM (scalar prefetch).
    # table_ref: (N, 8, Bpad) f32, whole table resident in VMEM.
    #            rows = (x1, y1, x2, y2, conf, pre-mapped label, 0, 0).
    # out_ref  : (FP, 8, Bpad) f32 packed rows =
    #            (x1, y1, x2, y2, conf, label, keep, 0), zeroed where keep==0.
    step = pl.program_id(0)
    frames_per_step, attrs, bpad = out_ref.shape

    # Sublane-index masks, built once per grid step; everything below is
    # whole-vreg VPU work (no concatenate, no XLU shuffles).
    row = lax.broadcasted_iota(jnp.int32, (attrs, bpad), 0)
    is_coord = row < 4        # rows 0..3 -> truncated coords
    is_keepflag = row == 6    # row 6 -> keep marker

    for k in range(frames_per_step):  # static, small -> unrolled by construction
        img = idx_ref[step * frames_per_step + k]
        data = table_ref[img]                                   # (8, Bpad) dynamic VMEM load
        conf_b = jnp.broadcast_to(data[4:5, :], (attrs, bpad))  # conf on every sublane
        keep_b = conf_b >= CONF_THRESH                          # (8, Bpad) bool
        # int() in torch truncates toward zero -> jnp.trunc.
        vals = jnp.where(is_coord, jnp.trunc(data), data)       # rows 4/5 pass through, 6/7 are 0
        vals = jnp.where(is_keepflag, 1.0, vals)                # row 6 := 1 (keep flag)
        out_ref[k] = jnp.where(keep_b, vals, 0.0)               # filtered / padded boxes -> 0


def prepare_bbox_table(bboxes, label_map):
    """(N, B, 6) box-major detections + (C,) int label map ->
    (N, 8, Bpad) attribute-major f32 table with labels pre-mapped.

    Rows: x1, y1, x2, y2, conf, mapped_label, 0, 0.  Lane axis = box axis,
    padded to a multiple of 128.  Built once at load time (layout plumbing,
    not per-query work); the label map gather runs here, not in the kernel.
    """
    n, b, a = bboxes.shape
    bpad = max(LANE, ((b + LANE - 1) // LANE) * LANE)
    coords_conf = bboxes[..., 0:5].astype(jnp.float32)
    # Pre-map labels.  OOB ids clamp here (torch's dict lookup would raise).
    ids = jnp.clip(bboxes[..., 5].astype(jnp.int32), 0, label_map.shape[0] - 1)
    mapped = label_map[ids].astype(jnp.float32)[..., None]                # (N, B, 1)
    t = jnp.concatenate([coords_conf, mapped], axis=-1)                   # (N, B, 6)
    t = jnp.transpose(t, (0, 2, 1))                                       # (N, 6, B)
    t = jnp.pad(t, ((0, 0), (0, SUBLANE - 6), (0, bpad - b)))             # (N, 8, Bpad)
    return t


def gdino_detect(idx, bbox_table, num_cores=2):
    """Batched GDino detection filter.

    idx:        (K,) int32 image indices (one per resolved frame path).
    bbox_table: (N, 8, Bpad) attribute-major table from prepare_bbox_table.

    Returns a packed attribute-major slab (K, 8, Bpad) f32 with rows
    (x1, y1, x2, y2, conf, mapped_label, keep, 0).  Boxes with keep == 0 are
    filtered (conf < 0.35) or padding and are zeroed, not removed.
    """
    num_images, attrs, bpad = bbox_table.shape
    k = idx.shape[0]

    # Guard the dynamic VMEM index: OOB reads are unchecked on TPU.
    idx = jnp.clip(idx.astype(jnp.int32), 0, num_images - 1)

    # 1-2 fat grid steps with the whole table resident in VMEM.  Per-frame
    # compute is ~5 vreg ops, so per-step pipeline overhead + tiny DMAs would
    # dominate with a K-step grid.  Two steps keep both TCs busy on v7x.
    grid = max(1, min(num_cores, k))
    fp = pl.cdiv(k, grid)
    k_pad = grid * fp
    if k_pad != k:
        idx = jnp.pad(idx, (0, k_pad - k))

    grid_spec = pltpu.PrefetchScalarGridSpec(
        num_scalar_prefetch=1,
        grid=(grid,),
        in_specs=[
            # Whole table, same block every step -> stays resident, one DMA.
            # NOTE: if N * 8 * Bpad * 4B grows toward tens of MiB (v7x has
            # 64 MiB VMEM / 32 MiB scoped default), set vmem_limit_bytes or
            # tile over N instead.
            pl.BlockSpec((num_images, attrs, bpad), lambda i, idx_ref: (0, 0, 0)),
        ],
        out_specs=pl.BlockSpec((fp, attrs, bpad), lambda i, idx_ref: (i, 0, 0)),
    )

    packed = pl.pallas_call(
        _detect_kernel,
        out_shape=jax.ShapeDtypeStruct((k_pad, attrs, bpad), jnp.float32),
        grid_spec=grid_spec,
        compiler_params=pltpu.CompilerParams(
            dimension_semantics=("parallel",)),  # uses both TCs on v7x; no-op on v5e/v6e
    )(idx, bbox_table)
    return packed[:k]


def _resolve_index(frame_path, image_dict):
    # TODO(synk): pure-Python path parsing / dict lookup -- no Pallas equivalent.
    parts = frame_path.split("/")
    file_name = parts[-2] + "/" + parts[-1]
    idx = image_dict.get(file_name)
    if idx is None:
        raise ValueError(
            f"Imagen {file_name} no encontrada en el diccionario de imágenes.")
    return idx


if __name__ == "__main__":
    key = jax.random.PRNGKey(0)
    k_coords, k_conf, k_label = jax.random.split(key, 3)

    num_images, max_boxes, num_classes = 8, 16, 10

    # Synthetic deterministic "bboxes['res_info']" tensor: (N, B, 6).
    xy = jax.random.uniform(k_coords, (num_images, max_boxes, 4), jnp.float32) * 224.0
    conf = jax.random.uniform(k_conf, (num_images, max_boxes, 1), jnp.float32)
    label = jax.random.randint(
        k_label, (num_images, max_boxes, 1), 0, num_classes).astype(jnp.float32)
    bboxes = jnp.concatenate([xy, conf, label], axis=-1)

    # Synthetic label map (int id -> int id stand-in for the string label map).
    label_map = (jnp.arange(num_classes, dtype=jnp.int32) * 7 + 3) % 100

    # Synthetic image_dict matching the torch module's lookup behavior.
    image_dict = {f"video_{v:02d}/frame_{f:04d}.jpg": v * 2 + f
                  for v in range(4) for f in range(2)}
    frame_paths = [
        "/data/ADL/video_00/frame_0000.jpg",
        "/data/ADL/video_01/frame_0001.jpg",
        "/data/ADL/video_02/frame_0000.jpg",
        "/data/ADL/video_03/frame_0001.jpg",
    ]
    idx = jnp.array([_resolve_index(p, image_dict) for p in frame_paths],
                    dtype=jnp.int32)                       # (K,) batched lookups

    bbox_table = prepare_bbox_table(bboxes, label_map)     # (8, 8, 128), built once

    packed = gdino_detect(idx, bbox_table)                  # (K, 8, 128) packed slab
    jax.block_until_ready(packed)

    # Sanity check against a plain-JAX reference of the torch filter semantics
    # (attribute-major comparison -- no transposes on the hot path).
    for kf in range(idx.shape[0]):
        row = bboxes[int(idx[kf])]
        ref_keep = row[:, 4] >= CONF_THRESH
        ref_coords = jnp.where(ref_keep[:, None], jnp.trunc(row[:, 0:4]), 0.0)
        ref_conf = jnp.where(ref_keep, row[:, 4], 0.0)
        ref_labels = jnp.where(
            ref_keep, label_map[row[:, 5].astype(jnp.int32)].astype(jnp.float32), 0.0)

        got = packed[kf]                                     # (8, Bpad)
        assert bool(jnp.all(got[0:4, :max_boxes].T == ref_coords))
        assert bool(jnp.allclose(got[4, :max_boxes], ref_conf))
        assert bool(jnp.all(got[5, :max_boxes] == ref_labels))
        assert bool(jnp.all(got[6, :max_boxes] == ref_keep.astype(jnp.float32)))
        assert bool(jnp.all(got[:, max_boxes:] == 0.0))      # padding filtered

    print("KERNEL_OK")
</pallas_src>

<mosaic_0001>
module attributes {stable_mosaic.version = 11 : i64} {
  func.func @_detect_kernel(%arg0: i32, %arg1: memref<4xi32, #tpu.memory_space<smem>>, %arg2: memref<8x8x128xf32, #tpu.memory_space<vmem>>, %arg3: memref<2x8x128xf32, #tpu.memory_space<vmem>>) attributes {dimension_semantics = [#tpu.dimension_semantics<parallel>], iteration_bounds = array<i64: 2>, scalar_prefetch = 1 : i64, scratch_operands = 0 : i64, tpu.core_type = #tpu.core_type<tc>, window_params = [{pipeline_mode = #tpu.pipeline_mode<synchronous>, transform_indices = @transform_0, window_bounds = array<i64: 8, 8, 128>}, {transform_indices = @transform_1, window_bounds = array<i64: 2, 8, 128>}]} {
    %0 = tpu.iota {dimensions = array<i32: 0>} : vector<8x128xi32>
    %c4_i32 = arith.constant 4 : i32
    %1 = vector.broadcast %c4_i32 : i32 to vector<8x128xi32>
    %2 = arith.cmpi slt, %0, %1 : vector<8x128xi32>
    %c6_i32 = arith.constant 6 : i32
    %3 = vector.broadcast %c6_i32 : i32 to vector<8x128xi32>
    %4 = arith.cmpi eq, %0, %3 : vector<8x128xi32>
    %c2_i32 = arith.constant 2 : i32
    %5 = arith.muli %arg0, %c2_i32 : i32
    %c0_i32 = arith.constant 0 : i32
    %6 = arith.addi %5, %c0_i32 : i32
    %7 = arith.index_cast %6 : i32 to index
    %8 = memref.load %arg1[%7] : memref<4xi32, #tpu.memory_space<smem>>
    %9 = arith.index_cast %8 : i32 to index
    %c0 = arith.constant 0 : index
    %c0_0 = arith.constant 0 : index
    %10 = vector.load %arg2[%9, %c0, %c0_0] : memref<8x8x128xf32, #tpu.memory_space<vmem>>, vector<1x8x128xf32>
    %11 = vector.shape_cast %10 : vector<1x8x128xf32> to vector<8x128xf32>
    %12 = vector.extract_strided_slice %11 {offsets = [4, 0], sizes = [1, 128], strides = [1, 1]} : vector<8x128xf32> to vector<1x128xf32>
    %13 = vector.shape_cast %12 : vector<1x128xf32> to vector<1x128xf32>
    %14 = vector.broadcast %13 : vector<1x128xf32> to vector<8x128xf32>
    %cst = arith.constant 3.500000e-01 : f32
    %15 = vector.broadcast %cst : f32 to vector<8x128xf32>
    %16 = arith.cmpf oge, %14, %15 : vector<8x128xf32>
    %cst_1 = arith.constant 0.000000e+00 : f32
    %17 = vector.broadcast %cst_1 : f32 to vector<8x128xf32>
    %18 = arith.cmpf olt, %11, %17 : vector<8x128xf32>
    %19 = math.ceil %11 : vector<8x128xf32>
    %20 = math.floor %11 : vector<8x128xf32>
    %21 = arith.select %18, %19, %20 : vector<8x128xi1>, vector<8x128xf32>
    %22 = arith.select %2, %21, %11 : vector<8x128xi1>, vector<8x128xf32>
    %cst_2 = arith.constant 1.000000e+00 : f32
    %23 = vector.broadcast %cst_2 : f32 to vector<8x128xf32>
    %24 = arith.select %4, %23, %22 : vector<8x128xi1>, vector<8x128xf32>
    %cst_3 = arith.constant 0.000000e+00 : f32
    %25 = vector.broadcast %cst_3 : f32 to vector<8x128xf32>
    %26 = arith.select %16, %24, %25 : vector<8x128xi1>, vector<8x128xf32>
    %c0_4 = arith.constant 0 : index
    %c0_5 = arith.constant 0 : index
    %c0_6 = arith.constant 0 : index
    %27 = vector.load %arg3[%c0_4, %c0_5, %c0_6] : memref<2x8x128xf32, #tpu.memory_space<vmem>>, vector<1x8x128xf32>
    %28 = vector.shape_cast %27 : vector<1x8x128xf32> to vector<8x128xf32>
    %29 = vector.shape_cast %26 : vector<8x128xf32> to vector<1x8x128xf32>
    tpu.vector_store %arg3[%c0_4, %c0_5, %c0_6], %29 {strides = array<i32>} : memref<2x8x128xf32, #tpu.memory_space<vmem>>, vector<1x8x128xf32>,
    %c2_i32_7 = arith.constant 2 : i32
    %30 = arith.muli %arg0, %c2_i32_7 : i32
    %c1_i32 = arith.constant 1 : i32
    %31 = arith.addi %30, %c1_i32 : i32
    %32 = arith.index_cast %31 : i32 to index
    %33 = memref.load %arg1[%32] : memref<4xi32, #tpu.memory_space<smem>>
    %34 = arith.index_cast %33 : i32 to index
    %c0_8 = arith.constant 0 : index
    %c0_9 = arith.constant 0 : index
    %35 = vector.load %arg2[%34, %c0_8, %c0_9] : memref<8x8x128xf32, #tpu.memory_space<vmem>>, vector<1x8x128xf32>
    %36 = vector.shape_cast %35 : vector<1x8x128xf32> to vector<8x128xf32>
    %37 = vector.extract_strided_slice %36 {offsets = [4, 0], sizes = [1, 128], strides = [1, 1]} : vector<8x128xf32> to vector<1x128xf32>
    %38 = vector.shape_cast %37 : vector<1x128xf32> to vector<1x128xf32>
    %39 = vector.broadcast %38 : vector<1x128xf32> to vector<8x128xf32>
    %cst_10 = arith.constant 3.500000e-01 : f32
    %40 = vector.broadcast %cst_10 : f32 to vector<8x128xf32>
    %41 = arith.cmpf oge, %39, %40 : vector<8x128xf32>
    %cst_11 = arith.constant 0.000000e+00 : f32
    %42 = vector.broadcast %cst_11 : f32 to vector<8x128xf32>
    %43 = arith.cmpf olt, %36, %42 : vector<8x128xf32>
    %44 = math.ceil %36 : vector<8x128xf32>
    %45 = math.floor %36 : vector<8x128xf32>
    %46 = arith.select %43, %44, %45 : vector<8x128xi1>, vector<8x128xf32>
    %47 = arith.select %2, %46, %36 : vector<8x128xi1>, vector<8x128xf32>
    %cst_12 = arith.constant 1.000000e+00 : f32
    %48 = vector.broadcast %cst_12 : f32 to vector<8x128xf32>
    %49 = arith.select %4, %48, %47 : vector<8x128xi1>, vector<8x128xf32>
    %cst_13 = arith.constant 0.000000e+00 : f32
    %50 = vector.broadcast %cst_13 : f32 to vector<8x128xf32>
    %51 = arith.select %41, %49, %50 : vector<8x128xi1>, vector<8x128xf32>
    %c1 = arith.constant 1 : index
    %c0_14 = arith.constant 0 : index
    %c0_15 = arith.constant 0 : index
    %52 = vector.load %arg3[%c1, %c0_14, %c0_15] : memref<2x8x128xf32, #tpu.memory_space<vmem>>, vector<1x8x128xf32>
    %53 = vector.shape_cast %52 : vector<1x8x128xf32> to vector<8x128xf32>
    %54 = vector.shape_cast %51 : vector<8x128xf32> to vector<1x8x128xf32>
    tpu.vector_store %arg3[%c1, %c0_14, %c0_15], %54 {strides = array<i32>} : memref<2x8x128xf32, #tpu.memory_space<vmem>>, vector<1x8x128xf32>,
    return
  }
  func.func @transform_0(%arg0: i32, %arg1: memref<4xi32, #tpu.memory_space<smem>>) -> (i32, i32, i32) {
    %c0_i32 = arith.constant 0 : i32
    %c0_i32_0 = arith.constant 0 : i32
    %c0_i32_1 = arith.constant 0 : i32
    %c0_i32_2 = arith.constant 0 : i32
    return %c0_i32, %c0_i32_0, %c0_i32_1 : i32, i32, i32
  }
  func.func @transform_1(%arg0: i32, %arg1: memref<4xi32, #tpu.memory_space<smem>>) -> (i32, i32, i32) {
    %c0_i32 = arith.constant 0 : i32
    %c0_i32_0 = arith.constant 0 : i32
    %c0_i32_1 = arith.constant 0 : i32
    return %arg0, %c0_i32, %c0_i32_0 : i32, i32, i32
  }
}

</mosaic_0001>

<llo_original>
// kernel: tpu_custom_call.1
$region0: #{tpu_custom_call.1}
  #allocation0 [shape = 'u32[]', space=smem, size = 0x4, offset = 0x4, fixed_abs, tag = 'smem constant byte address 0x4 - core index']
  #allocation1 [shape = 'u32[144,128]{1,0:T(1,128)}', space=vmem, size = 0x12000, scoped, tag = 'internal scratch']
  #allocation2 [shape = 's32[1]{0}', space=sflag, size = 0x4, scoped, tag = 'scoped memory for tpu_custom_call.1']
  #allocation3 [shape = 'u8[512]{0}', space=smem, size = 0x200, scoped, tag = 'prefetched SMEM operand 0']
  %s0 = inlined_call_operand.hbm [shape: s32[4], index: 0, kind: input, shape index: {}]
  %s1 = inlined_call_operand.hbm [shape: f32[8,8,128], index: 1, kind: input, shape index: {}]
  %s2 = inlined_call_operand.hbm [shape: f32[4,8,128], index: 2, kind: output, shape index: {}]
  %s3 = sld [smem:[#allocation0]]
  $region41: #{tpu_custom_call.1} parent=0
    _
  %s5 = ssub.s32 1, %s3
  %s6 = scalar_select 0, %s5, %s3
  %8 = dma.hbm_to_smem %s0, 16, [#allocation3], [#allocation2]
  %9 = dma.done [#allocation2], 16
  %10 = sfence
  $region1: #{tpu_custom_call.1} parent=0
    #allocation4 [shape = 'u8[32768]{0}', space=vmem, size = 0x8000, scoped, tag = 'input window, operand 1, single buffered']
    #allocation5 [shape = 's32[2]{0}', space=sflag, size = 0x8, scoped, tag = 'scoped memory for tpu_custom_call.1']
    #allocation6 [shape = 's32[2]{0}', space=sflag, size = 0x8, scoped, tag = 'scoped memory for tpu_custom_call.1']
    #allocation7 [shape = 'u8[16384]{0}', space=vmem, size = 0x4000, scoped, tag = 'output window, operand 0']
    %11 = vsyncpa [#allocation5], 0
    %12 = vsyncpa [#allocation6], 0
    %s13 = scalar_lea.sflag [#allocation6], 1
    %14 = vsyncpa %s13, 0
    loop: start=0, step=1, limit=4
    $region2: #{tpu_custom_call.1} parent=1 // loop_pre_header
      _
    $region3: #{tpu_custom_call.1} parent=1 // loop_header
      %s16 = sphi 0, %s20
      %p17 = scmp.ge.s32.totalorder %s16, 4
      %s24 = sphi 0, %s24
      %s26 = sphi 0, %s24
      %s27 = sphi 0, %s26
      %s41 = sphi 0, %s27
      %s47 = sphi 0, %s49
      %s50 = sphi 0, %s47
      %s51 = sphi 0, %s50
      %s67 = sphi 0, %s51
    $region4: #{tpu_custom_call.1} parent=1 // loop_header_branch
      %19 = sbr.rel (%p17) target = $region8
    $region5: #{tpu_custom_call.1} parent=1 // loop_body
      %s21 = ssub.s32 %s16, 1
      %s22 = ssub.s32 %s16, 2
      %s23 = sadd.s32 %s16, 1
      %s25 = sadd.s32 %s24, 1
      %p28 = scmp.eq.s32.totalorder %s16, 1
      %p29 = scmp.ne.s32.totalorder %s24, %s26
      %p30 = scmp.eq.s32.totalorder %s16, 0
      %p31 = por %p29, %p30
      %p32 = scmp.ne.s32.totalorder %s24, %s26
      %p33 = scmp.eq.s32.totalorder %s21, 1
      %p34 = por %p32, %p33
      %p35 = scmp.ne.s32.totalorder %s26, %s27
      %p36 = scmp.eq.s32.totalorder %s21, 0
      %p37 = por %p35, %p36
      %p38 = scmp.ne.s32.totalorder %s26, %s27
      %p39 = scmp.eq.s32.totalorder %s22, 1
      %p40 = por %p38, %p39
      %p42 = scmp.ne.s32.totalorder %s27, %s41
      %p43 = scmp.eq.s32.totalorder %s22, 0
      %p44 = por %p42, %p43
      %s45 = ssub.s32 %s16, %s23
      %p46 = scmp.eq.s32.totalorder %s45, 0
      %s48 = sadd.s32 %s47, 1
      %s49 = scalar_select %p46, %s47, %s48
      %p52 = pneg %p46
      %p53 = scmp.eq.s32.totalorder %s16, 1
      %p54 = por %p52, %p53
      %p55 = scmp.ne.s32.totalorder %s47, %s50
      %p56 = scmp.eq.s32.totalorder %s16, 0
      %p57 = por %p55, %p56
      %p58 = scmp.ne.s32.totalorder %s47, %s50
      %p59 = scmp.eq.s32.totalorder %s21, 1
      %p60 = por %p58, %p59
      %p61 = scmp.ne.s32.totalorder %s50, %s51
      %p62 = scmp.eq.s32.totalorder %s21, 0
      %p63 = por %p61, %p62
      %p64 = scmp.ne.s32.totalorder %s50, %s51
      %p65 = scmp.eq.s32.totalorder %s22, 1
      %p66 = por %p64, %p65
      %p68 = scmp.ne.s32.totalorder %s51, %s67
      %p69 = scmp.eq.s32.totalorder %s22, 0
      %p70 = por %p68, %p69
      %p71 = scmp.le.s32.totalorder 1, %s16
      %p72 = scmp.lt.s32.totalorder %s16, 3
      %p73 = pnand %p71, %p72
      %p74 = pneg %p73
      // Predicated region
      $region9: #{tpu_custom_call.1} parent=5 // pred_check
        _
      $region10: #{tpu_custom_call.1} parent=5 // pred_check_branch
        %76 = sbr.rel (%p73) target = $region12
      $region11: #{tpu_custom_call.1} parent=5 // pred_region
        %s77 = ssub.s32 %s16, 1
        // Predicated region
        $region13: #{tpu_custom_call.1} parent=11 // pred_check
          %p78 = pneg %p37
        $region14: #{tpu_custom_call.1} parent=11 // pred_check_branch
          %80 = sbr.rel (%p78) target = $region16
        $region15: #{tpu_custom_call.1} parent=11 // pred_region
          %s82 = ssub.s32 1024, 1024
          %83 = vsyncadd [#allocation5], %s82
          %s84 = sshll.u32 [#allocation4], 4
          %s85 = int_to_ptr.vmem [resolvable:$true] %s84
          %90 = dma.hbm_to_vmem [thread:$0]  %s1, 1024, %s85, [#allocation5], 128, 128, 8
        $region16: #{tpu_custom_call.1} parent=11 // pred_fallthru
          _
      $region12: #{tpu_custom_call.1} parent=5 // pred_fallthru
        _
      %p91 = scmp.lt.s32.totalorder %s16, 2
      // Predicated region
      $region17: #{tpu_custom_call.1} parent=5 // pred_check
        %p92 = pneg %p91
      $region18: #{tpu_custom_call.1} parent=5 // pred_check_branch
        %94 = sbr.rel (%p92) target = $region20
      $region19: #{tpu_custom_call.1} parent=5 // pred_region
        _
      $region20: #{tpu_custom_call.1} parent=5 // pred_fallthru
        _
      %p95 = scmp.le.s32.totalorder 1, %s16
      %p96 = scmp.lt.s32.totalorder %s16, 3
      %p97 = pnand %p95, %p96
      %p98 = pneg %p97
      // Predicated region
      $region21: #{tpu_custom_call.1} parent=5 // pred_check
        _
      $region22: #{tpu_custom_call.1} parent=5 // pred_check_branch
        %100 = sbr.rel (%p97) target = $region24
      $region23: #{tpu_custom_call.1} parent=5 // pred_region
        %s101 = ssub.s32 %s16, 1
        // Predicated region
        $region25: #{tpu_custom_call.1} parent=23 // pred_check
          %p102 = pneg %p37
        $region26: #{tpu_custom_call.1} parent=23 // pred_check_branch
          %104 = sbr.rel (%p102) target = $region28
        $region27: #{tpu_custom_call.1} parent=23 // pred_region
          %105 = dma.done [#allocation5], 1024
        $region28: #{tpu_custom_call.1} parent=23 // pred_fallthru
          _
        %p106 = pneg %p37
        %p107 = pneg %p34
        %p108 = pneg %p63
        %p109 = pneg %p60
        %s110 = sand.u32 %s50, 1
        %s111 = scalar_lea.sflag [#allocation6], %s110
        %s112 = sand.u32 %s50, 1
        %s113 = smul.addr %s112, 16
        %s114 = scalar_lea.vmem [#allocation7], %s113
        %s115 = smul.u32 2, %s21
        %v116 = vlaneseq
        %v117 = vshrl.u32 %v116, 7
        %vm118 = vcmp.lt.s32.totalorder %v117, 4
        %vm119 = vcmp.eq.s32.totalorder %v117, 6
        %s120 = smul.u32 %s21, 2
        %s121 = sld [smem:[#allocation3 + %s120]]
        %s122 = smul.u32 %s121, 8
        %s123 = scalar_lea.vmem [#allocation4], %s122
        %v124 = vld [vmem:[%s123] sm:$0xff]
        %v125 = vlaneseq
        %v126 = vshrl.u32 %v125, 7
        %v127 = vsub.s32 4, %v126
        %v128 = vrot.slane %v124, %v127
        %vm129 = vcmp.ge.f32.partialorder %v128, 0.35
        %vm130 = vcmp.lt.f32.partialorder %v124, 0.0
        %v131 = vceil.f32 %v124
        %v132 = vfloor.f32 %v124
        %v133 = vsel %vm130, %v131, %v132
        %v134 = vsel %vm118, %v133, %v124
        %v135 = vsel %vm119, 1.0, %v134
        %v136 = vsel %vm129, %v135, 0.0
        %137 = vst [vmem:[%s114] sm:$0xff] %v136
        %s138 = sadd.s32 %s120, 1
        %s139 = sld [smem:[#allocation3 + %s138]]
        %s140 = smul.u32 %s139, 8
        %s141 = scalar_lea.vmem [#allocation4], %s140
        %v142 = vld [vmem:[%s141] sm:$0xff]
        %v143 = vlaneseq
        %v144 = vshrl.u32 %v143, 7
        %v145 = vsub.s32 4, %v144
        %v146 = vrot.slane %v142, %v145
        %vm147 = vcmp.ge.f32.partialorder %v146, 0.35
        %vm148 = vcmp.lt.f32.partialorder %v142, 0.0
        %v149 = vceil.f32 %v142
        %v150 = vfloor.f32 %v142
        %v151 = vsel %vm148, %v149, %v150
        %v152 = vsel %vm118, %v151, %v142
        %v153 = vsel %vm119, 1.0, %v152
        %v154 = vsel %vm147, %v153, 0.0
        %s155 = scalar_lea.vmem %s114, 8 [#allocation7]
        %156 = vst [vmem:[%s155] sm:$0xff] %v154
        %s157 = sand.u32 %s50, 1
        %s158 = scalar_lea.sflag [#allocation6], %s157
        %s159 = sand.u32 %s50, 1
        %s160 = smul.addr %s159, 16
        %s161 = scalar_lea.vmem [#allocation7], %s160
        // Predicated region
        $region29: #{tpu_custom_call.1} parent=23 // pred_check
          %p162 = pneg %p60
        $region30: #{tpu_custom_call.1} parent=23 // pred_check_branch
          %164 = sbr.rel (%p162) target = $region32
        $region31: #{tpu_custom_call.1} parent=23 // pred_region
          %s165 = smul.u32 2, %s21
          %s167 = ssub.s32 256, 256
          %168 = vsyncadd %s158, %s167
          %s169 = smul.addr %s165, 128
          %s170 = scalar_lea.hbm %s2, %s169
          %s171 = sshll.u32 %s161, 4
          %s172 = int_to_ptr.vmem [resolvable:$true] %s171
          %177 = dma.vmem_to_hbm [thread:$0]  %s172, 256, %s170, %s158, 128, 128, 8
        $region32: #{tpu_custom_call.1} parent=23 // pred_fallthru
          _
      $region24: #{tpu_custom_call.1} parent=5 // pred_fallthru
        _
      %p178 = scmp.le.s32.totalorder 2, %s16
      // Predicated region
      $region33: #{tpu_custom_call.1} parent=5 // pred_check
        %p179 = pneg %p178
      $region34: #{tpu_custom_call.1} parent=5 // pred_check_branch
        %181 = sbr.rel (%p179) target = $region36
      $region35: #{tpu_custom_call.1} parent=5 // pred_region
        %s182 = ssub.s32 %s16, 2
        // Predicated region
        $region37: #{tpu_custom_call.1} parent=35 // pred_check
          %p183 = pneg %p66
        $region38: #{tpu_custom_call.1} parent=35 // pred_check_branch
          %185 = sbr.rel (%p183) target = $region40
        $region39: #{tpu_custom_call.1} parent=35 // pred_region
          %s186 = sand.u32 %s51, 1
          %s187 = scalar_lea.sflag [#allocation6], %s186
          %s188 = sand.u32 %s51, 1
          %s189 = smul.addr %s188, 16
          %s190 = scalar_lea.vmem [#allocation7], %s189
          %191 = dma.done %s187, 256
        $region40: #{tpu_custom_call.1} parent=35 // pred_fallthru
          _
      $region36: #{tpu_custom_call.1} parent=5 // pred_fallthru
        _
    $region6: #{tpu_custom_call.1} parent=1 // loop_footer
      %s20 = sadd.s32 1, %s16
    $region7: #{tpu_custom_call.1} parent=1 // loop_footer_branch
      %15 = sbr.rel target = $region3
    $region8: #{tpu_custom_call.1} parent=1 // loop_exit
      _
    %192 = vsyncpa [#allocation5], 1
    %s193 = scalar_lea.sflag [#allocation5], 1
    %194 = vsyncpa %s193, 1
    %195 = vsyncpa [#allocation6], 1
    %s196 = scalar_lea.sflag [#allocation6], 1
    %197 = vsyncpa %s196, 1

</llo_original>
